<compile_context>
chip_gen: v7x
topology: tpu7x:2x2x1
jax: 0.10.0
libtpu: 0.0.40
codegen_flags: <defaults>
</compile_context>

<pallas_src>
import jax
import jax.numpy as jnp
from jax import lax
from jax.experimental import pallas as pl
from jax.experimental.pallas import tpu as pltpu


def _attention_cell_kernel(
    h_ref,       # [Bb, H]    prev hidden (f32)
    c_ref,       # [Bb, H]    prev cell (f32)
    bhp_ref,     # [Bb, T, H] precomputed i2h(batch_H) (f32)
    bh_ref,      # [Bb, T, D] encoder features (MXU dtype)
    emb_ref,     # [Bb, 4H]   gathered char rows of the LSTM input weight (f32)
    whcat_ref,   # [H, 5H]    fused [W_h2h^T | W_hh^T] (MXU dtype)
    bh2h_ref,    # [1, H]     h2h bias (f32)
    wscore_ref,  # [1, H]     score weight row (f32)
    wgc_ref,     # [D, 4H]    context part of the LSTM input weight (MXU dtype)
    bg_ref,      # [1, 4H]    fused LSTM bias b_ih + b_hh (f32)
    hout_ref,    # [Bb, H]    new hidden
    cout_ref,    # [Bb, H]    new cell
    alpha_ref,   # [Bb, T]    attention weights (lane-dense, T on lanes)
):
    H = h_ref.shape[-1]
    wd = whcat_ref.dtype

    h_prev = h_ref[...].astype(jnp.float32)                     # [Bb, H]
    c_prev = c_ref[...].astype(jnp.float32)                     # [Bb, H]

    # --- fused h2h + hidden-gate projection: one MXU push for both consumers.
    hcat = jnp.dot(h_prev.astype(wd), whcat_ref[...],
                   preferred_element_type=jnp.float32)          # [Bb, 5H]
    hproj = hcat[:, :H] + bh2h_ref[...]                         # [Bb, H]
    hgate = hcat[:, H:]                                         # [Bb, 4H]

    # --- e[b, t] = <tanh(batch_H_proj[b, t] + hproj[b]), w_score> -----------
    s = jnp.tanh(bhp_ref[...] + hproj[:, None, :])              # [Bb, T, H]
    e = jnp.sum(s * wscore_ref[...][None, :, :], axis=-1)       # [Bb, T]

    # --- softmax over T (T on lanes -> lane-dense alpha store) --------------
    e_max = jnp.max(e, axis=-1, keepdims=True)                  # [Bb, 1]
    p = jnp.exp(e - e_max)                                      # [Bb, T]
    denom = jnp.sum(p, axis=-1, keepdims=True)                  # [Bb, 1]
    alpha = p * pl.reciprocal(denom, approx=True)               # [Bb, T]
    alpha_ref[...] = alpha

    # --- context[b] = alpha[b] @ batch_H[b]  (batched MXU contraction) ------
    ctx3 = jnp.einsum("bqt,btd->bqd",
                      alpha[:, None, :].astype(bh_ref.dtype), bh_ref[...],
                      preferred_element_type=jnp.float32)       # [Bb, 1, D]
    ctx = ctx3[:, 0, :]                                         # [Bb, D]

    # --- LSTM gates: ctx part (MXU) + hidden part (hgate) + char row + bias -
    gates = (jnp.dot(ctx.astype(wd), wgc_ref[...],
                     preferred_element_type=jnp.float32)
             + hgate + emb_ref[...] + bg_ref[...])              # [Bb, 4H]

    i_g = jax.nn.sigmoid(gates[:, 0:H])
    f_g = jax.nn.sigmoid(gates[:, H:2 * H])
    g_g = jnp.tanh(gates[:, 2 * H:3 * H])
    o_g = jax.nn.sigmoid(gates[:, 3 * H:4 * H])

    c_new = f_g * c_prev + i_g * g_g
    h_new = o_g * jnp.tanh(c_new)

    hout_ref[...] = h_new.astype(hout_ref.dtype)
    cout_ref[...] = c_new.astype(cout_ref.dtype)


def _pad_batch(x, b_pad):
    if b_pad == x.shape[0]:
        return x
    cfg = [(0, b_pad - x.shape[0])] + [(0, 0)] * (x.ndim - 1)
    return jnp.pad(x, cfg)


def attention_cell_1d(prev_hidden, batch_H, char_onehots, params, *,
                      mxu_dtype=jnp.float32, batch_H_proj=None,
                      max_batch_block=128):
    """Drop-in for AttentionCell1D.forward.

    prev_hidden = (h, c), each [B, H]; batch_H [B, T, D]; char_onehots [B, E]
    one-hot (or [B] int indices).  Returns ((h', c'), alpha[B, T, 1]).
    From a decode loop, pass batch_H_proj (= batch_H @ W_i2h^T, [B, T, H]) so
    the step-invariant projection is computed only once per sequence.
    """
    h, c = prev_hidden
    B, T, D = batch_H.shape
    H = h.shape[1]
    wd = jnp.dtype(mxu_dtype)
    f32 = jnp.float32

    if char_onehots.ndim == 2:
        # NOTE: assumes a strict one-hot; soft label vectors would need the
        # original [B,E] @ [E,4H] matmul path.
        char_idx = jnp.argmax(char_onehots, axis=-1).astype(jnp.int32)
    else:
        char_idx = char_onehots.astype(jnp.int32)

    # Step-invariant i2h projection, hoisted out of the kernel.
    if batch_H_proj is None:
        batch_H_proj = jnp.einsum("btd,dh->bth", batch_H.astype(f32),
                                  params["w_i2h"].astype(f32))

    # Char-index gather of the LSTM input-weight rows (replaces the one-hot
    # matmul and the per-step data-dependent scalar-prefetch DMA).
    emb = jnp.take(params["w_ih_e"], char_idx, axis=0).astype(f32)    # [B, 4H]

    # ---- batch blocking -----------------------------------------------------
    if B <= max_batch_block:
        blk_b, b_pad = B, B                       # whole batch in one block
    else:
        blk_b = max_batch_block                   # multiple of 8 by construction
        b_pad = -(-B // blk_b) * blk_b
    grid = (b_pad // blk_b,)

    h_p = _pad_batch(h.astype(f32), b_pad)
    c_p = _pad_batch(c.astype(f32), b_pad)
    bhp_p = _pad_batch(batch_H_proj.astype(f32), b_pad)
    bh_p = _pad_batch(batch_H.astype(wd), b_pad)
    emb_p = _pad_batch(emb, b_pad)

    w_hcat = params["w_hcat"].astype(wd)          # [H, 5H]
    b_h2h = params["b_h2h"].astype(f32)           # [1, H]
    w_score = params["w_score"].astype(f32)       # [1, H]
    w_gc = params["w_gates_ctx"].astype(wd)       # [D, 4H]
    b_g = params["b_gates"].astype(f32)           # [1, 4H]

    grid_spec = pltpu.PrefetchScalarGridSpec(
        num_scalar_prefetch=0,
        grid=grid,
        in_specs=[
            pl.BlockSpec((blk_b, H), lambda b: (b, 0)),          # h
            pl.BlockSpec((blk_b, H), lambda b: (b, 0)),          # c
            pl.BlockSpec((blk_b, T, H), lambda b: (b, 0, 0)),    # batch_H_proj
            pl.BlockSpec((blk_b, T, D), lambda b: (b, 0, 0)),    # batch_H
            pl.BlockSpec((blk_b, 4 * H), lambda b: (b, 0)),      # emb rows
            pl.BlockSpec((H, 5 * H), lambda b: (0, 0)),          # w_hcat
            pl.BlockSpec((1, H), lambda b: (0, 0)),              # b_h2h
            pl.BlockSpec((1, H), lambda b: (0, 0)),              # w_score
            pl.BlockSpec((D, 4 * H), lambda b: (0, 0)),          # w_gates_ctx
            pl.BlockSpec((1, 4 * H), lambda b: (0, 0)),          # b_gates
        ],
        out_specs=(
            pl.BlockSpec((blk_b, H), lambda b: (b, 0)),          # h_new
            pl.BlockSpec((blk_b, H), lambda b: (b, 0)),          # c_new
            pl.BlockSpec((blk_b, T), lambda b: (b, 0)),          # alpha (lane-dense)
        ),
    )

    # ---- honest VMEM budget (double-buffered blocks + resident weights) -----
    it = wd.itemsize
    io_bytes = (2 * blk_b * H * 4            # h, c
                + blk_b * T * H * 4          # batch_H_proj
                + blk_b * T * D * it         # batch_H
                + blk_b * 4 * H * 4          # emb rows
                + 2 * blk_b * H * 4          # h_new, c_new
                + blk_b * T * 4)             # alpha
    w_bytes = (5 * H * H * it + D * 4 * H * it + (H + H + 4 * H) * 4)
    vmem_limit = int(min(64 * 2 ** 20,
                         max(8 * 2 ** 20, 2 * (2 * io_bytes + 2 * w_bytes))))

    cost = pl.CostEstimate(
        flops=2 * B * (5 * H * H + T * H + T * D + D * 4 * H),
        transcendentals=B * (T * H + T + 5 * H),
        bytes_accessed=(4 * (2 * B * H + B * T * H + B * 4 * H
                             + 2 * B * H + B * T)
                        + it * (B * T * D + 5 * H * H + D * 4 * H)
                        + 4 * 6 * H),
    )

    h_out, c_out, alpha_out = pl.pallas_call(
        _attention_cell_kernel,
        grid_spec=grid_spec,
        out_shape=(
            jax.ShapeDtypeStruct((b_pad, H), f32),
            jax.ShapeDtypeStruct((b_pad, H), f32),
            jax.ShapeDtypeStruct((b_pad, T), f32),
        ),
        compiler_params=pltpu.CompilerParams(
            dimension_semantics=("parallel",),
            vmem_limit_bytes=vmem_limit,
        ),
        cost_estimate=cost,
        input_output_aliases={0: 0, 1: 1},   # h -> h_new, c -> c_new
    )(h_p, c_p, bhp_p, bh_p, emb_p, w_hcat, b_h2h, w_score, w_gc, b_g)

    h_new = h_out[:B]
    c_new = c_out[:B]
    alpha = alpha_out[:B][:, :, None]        # module returns [B, T, 1]
    return (h_new, c_new), alpha


def make_params(key, input_size, hidden_size, num_embeddings):
    """Deterministic synthetic parameters, shapes matching the PyTorch module."""
    ks = jax.random.split(key, 8)
    D, H, E = input_size, hidden_size, num_embeddings
    scale = 0.1

    w_i2h = jax.random.normal(ks[0], (H, D), jnp.float32) * scale      # Linear(D,H,bias=False)
    w_h2h = jax.random.normal(ks[1], (H, H), jnp.float32) * scale      # Linear(H,H)
    b_h2h = jax.random.normal(ks[2], (H,), jnp.float32) * scale
    w_score = jax.random.normal(ks[3], (1, H), jnp.float32) * scale    # Linear(H,1,bias=False)
    w_ih = jax.random.normal(ks[4], (4 * H, D + E), jnp.float32) * scale   # LSTMCell
    w_hh = jax.random.normal(ks[5], (4 * H, H), jnp.float32) * scale
    b_ih = jax.random.normal(ks[6], (4 * H,), jnp.float32) * scale
    b_hh = jax.random.normal(ks[7], (4 * H,), jnp.float32) * scale

    w_ih_t = w_ih.T                                                    # [D+E, 4H]
    return {
        "w_i2h": w_i2h.T,                                              # [D, H]
        # Fused h weight: [W_h2h^T | W_hh^T] -> one MXU push for both h2h and
        # the hidden part of the LSTM gates.
        "w_hcat": jnp.concatenate([w_h2h.T, w_hh.T], axis=1),          # [H, 5H]
        "b_h2h": b_h2h.reshape(1, H),                                  # [1, H]
        "w_score": w_score,                                            # [1, H]
        "w_gates_ctx": w_ih_t[:D, :],                                  # [D, 4H]
        "w_ih_e": w_ih_t[D:, :],                                       # [E, 4H] (one-hot rows)
        "b_gates": (b_ih + b_hh).reshape(1, 4 * H),                    # [1, 4H]
        "_raw": (w_i2h, w_h2h, b_h2h, w_score, w_ih, w_hh, b_ih, b_hh),
    }


def reference_forward(prev_hidden, batch_H, char_onehots, params):
    """Pure-JAX replica of the PyTorch forward, for correctness checking."""
    w_i2h, w_h2h, b_h2h, w_score, w_ih, w_hh, b_ih, b_hh = params["_raw"]
    h, c = prev_hidden
    H = h.shape[1]

    batch_H_proj = jnp.einsum("btd,hd->bth", batch_H, w_i2h)
    prev_hidden_proj = (h @ w_h2h.T + b_h2h)[:, None, :]
    e = jnp.einsum("bth,oh->bto", jnp.tanh(batch_H_proj + prev_hidden_proj), w_score)
    alpha = jax.nn.softmax(e, axis=1)
    context = jnp.einsum("bto,btd->bd", alpha, batch_H)
    concat_context = jnp.concatenate([context, char_onehots], axis=1)

    gates = concat_context @ w_ih.T + b_ih + h @ w_hh.T + b_hh
    i_g = jax.nn.sigmoid(gates[:, 0:H])
    f_g = jax.nn.sigmoid(gates[:, H:2 * H])
    g_g = jnp.tanh(gates[:, 2 * H:3 * H])
    o_g = jax.nn.sigmoid(gates[:, 3 * H:4 * H])
    c_new = f_g * c + i_g * g_g
    h_new = o_g * jnp.tanh(c_new)
    return (h_new, c_new), alpha


if __name__ == "__main__":
    B, T = 2, 8
    input_size, hidden_size, num_embeddings = 32, 32, 16

    key = jax.random.PRNGKey(0)
    k_h, k_c, k_bH, k_oh, k_p = jax.random.split(key, 5)

    h0 = jax.random.normal(k_h, (B, hidden_size), jnp.float32)
    c0 = jax.random.normal(k_c, (B, hidden_size), jnp.float32)
    batch_H = jax.random.normal(k_bH, (B, T, input_size), jnp.float32)
    char_idx = jax.random.randint(k_oh, (B,), 0, num_embeddings)
    char_onehots = jax.nn.one_hot(char_idx, num_embeddings, dtype=jnp.float32)

    params = make_params(k_p, input_size, hidden_size, num_embeddings)

    # Pure-JAX reference of the PyTorch forward.
    (h_ref_v, c_ref_v), alpha_ref_v = reference_forward(
        (h0, c0), batch_H, char_onehots, params)

    run = jax.jit(attention_cell_1d, static_argnames=("mxu_dtype",))

    # f32 run (tolerance slightly loosened for the approx-reciprocal softmax).
    (h_new, c_new), alpha = run((h0, c0), batch_H, char_onehots, params)
    jax.block_until_ready((h_new, c_new, alpha))
    assert h_new.shape == (B, hidden_size) and c_new.shape == (B, hidden_size)
    assert alpha.shape == (B, T, 1)
    assert jnp.allclose(alpha, alpha_ref_v, atol=5e-3, rtol=5e-3)
    assert jnp.allclose(h_new, h_ref_v, atol=5e-3, rtol=5e-3)
    assert jnp.allclose(c_new, c_ref_v, atol=5e-3, rtol=5e-3)

    # bf16 MXU-operand run (recommended for v6e/v7x); loose smoke-test tolerance.
    (h_bf, c_bf), alpha_bf = run((h0, c0), batch_H, char_onehots, params,
                                 mxu_dtype=jnp.bfloat16)
    jax.block_until_ready((h_bf, c_bf, alpha_bf))
    assert jnp.allclose(alpha_bf, alpha_ref_v, atol=5e-2, rtol=5e-2)
    assert jnp.allclose(h_bf, h_ref_v, atol=5e-2, rtol=5e-2)
    assert jnp.allclose(c_bf, c_ref_v, atol=5e-2, rtol=5e-2)

    print("KERNEL_OK")
</pallas_src>

<mosaic_0001>
module attributes {stable_mosaic.version = 11 : i64} {
  func.func @_attention_cell_kernel(%arg0: i32, %arg1: memref<2x32xf32, #tpu.memory_space<vmem>>, %arg2: memref<2x32xf32, #tpu.memory_space<vmem>>, %arg3: memref<2x8x32xf32, #tpu.memory_space<vmem>>, %arg4: memref<2x8x32xf32, #tpu.memory_space<vmem>>, %arg5: memref<2x128xf32, #tpu.memory_space<vmem>>, %arg6: memref<32x160xf32, #tpu.memory_space<vmem>>, %arg7: memref<1x32xf32, #tpu.memory_space<vmem>>, %arg8: memref<1x32xf32, #tpu.memory_space<vmem>>, %arg9: memref<32x128xf32, #tpu.memory_space<vmem>>, %arg10: memref<1x128xf32, #tpu.memory_space<vmem>>, %arg11: memref<2x32xf32, #tpu.memory_space<vmem>>, %arg12: memref<2x32xf32, #tpu.memory_space<vmem>>, %arg13: memref<2x8xf32, #tpu.memory_space<vmem>>) attributes {dimension_semantics = [#tpu.dimension_semantics<parallel>], iteration_bounds = array<i64: 1>, scalar_prefetch = 0 : i64, scratch_operands = 0 : i64, tpu.core_type = #tpu.core_type<tc>, window_params = [{transform_indices = @transform_0, window_bounds = array<i64: 2, 32>}, {transform_indices = @transform_1, window_bounds = array<i64: 2, 32>}, {transform_indices = @transform_2, window_bounds = array<i64: 2, 8, 32>}, {transform_indices = @transform_3, window_bounds = array<i64: 2, 8, 32>}, {transform_indices = @transform_4, window_bounds = array<i64: 2, 128>}, {pipeline_mode = #tpu.pipeline_mode<synchronous>, transform_indices = @transform_5, window_bounds = array<i64: 32, 160>}, {pipeline_mode = #tpu.pipeline_mode<synchronous>, transform_indices = @transform_6, window_bounds = array<i64: 1, 32>}, {pipeline_mode = #tpu.pipeline_mode<synchronous>, transform_indices = @transform_7, window_bounds = array<i64: 1, 32>}, {pipeline_mode = #tpu.pipeline_mode<synchronous>, transform_indices = @transform_8, window_bounds = array<i64: 32, 128>}, {pipeline_mode = #tpu.pipeline_mode<synchronous>, transform_indices = @transform_9, window_bounds = array<i64: 1, 128>}, {transform_indices = @transform_10, window_bounds = array<i64: 2, 32>}, {transform_indices = @transform_11, window_bounds = array<i64: 2, 32>}, {transform_indices = @transform_12, window_bounds = array<i64: 2, 8>}]} {
    %c0 = arith.constant 0 : index
    %c0_0 = arith.constant 0 : index
    %0 = vector.load %arg1[%c0, %c0_0] : memref<2x32xf32, #tpu.memory_space<vmem>>, vector<2x32xf32>
    %c0_1 = arith.constant 0 : index
    %c0_2 = arith.constant 0 : index
    %1 = vector.load %arg2[%c0_1, %c0_2] : memref<2x32xf32, #tpu.memory_space<vmem>>, vector<2x32xf32>
    %c0_3 = arith.constant 0 : index
    %c0_4 = arith.constant 0 : index
    %2 = vector.load %arg6[%c0_3, %c0_4] : memref<32x160xf32, #tpu.memory_space<vmem>>, vector<32x160xf32>
    %cst = arith.constant dense<0.000000e+00> : vector<2x160xf32>
    %3 = tpu.matmul %0, %2, %cst {dimension_numbers = #tpu.dot_dimension_numbers<[1], [0], [0], [1], [0, 0, 1, 1], [], []>} : vector<2x32xf32>, vector<32x160xf32>, vector<2x160xf32> -> vector<2x160xf32>
    %4 = vector.extract_strided_slice %3 {offsets = [0, 0], sizes = [2, 32], strides = [1, 1]} : vector<2x160xf32> to vector<2x32xf32>
    %c0_5 = arith.constant 0 : index
    %c0_6 = arith.constant 0 : index
    %5 = vector.load %arg7[%c0_5, %c0_6] : memref<1x32xf32, #tpu.memory_space<vmem>>, vector<1x32xf32>
    %6 = vector.broadcast %5 : vector<1x32xf32> to vector<2x32xf32>
    %7 = arith.addf %4, %6 : vector<2x32xf32>
    %8 = vector.extract_strided_slice %3 {offsets = [0, 32], sizes = [2, 128], strides = [1, 1]} : vector<2x160xf32> to vector<2x128xf32>
    %c0_7 = arith.constant 0 : index
    %c0_8 = arith.constant 0 : index
    %c0_9 = arith.constant 0 : index
    %9 = vector.load %arg3[%c0_7, %c0_8, %c0_9] : memref<2x8x32xf32, #tpu.memory_space<vmem>>, vector<2x8x32xf32>
    %10 = vector.shape_cast %7 : vector<2x32xf32> to vector<2x1x32xf32>
    %11 = vector.broadcast %10 : vector<2x1x32xf32> to vector<2x8x32xf32>
    %12 = arith.addf %9, %11 : vector<2x8x32xf32>
    %13 = math.tanh %12 : vector<2x8x32xf32>
    %c0_10 = arith.constant 0 : index
    %c0_11 = arith.constant 0 : index
    %14 = vector.load %arg8[%c0_10, %c0_11] : memref<1x32xf32, #tpu.memory_space<vmem>>, vector<1x32xf32>
    %15 = vector.shape_cast %14 : vector<1x32xf32> to vector<1x1x32xf32>
    %16 = vector.broadcast %15 : vector<1x1x32xf32> to vector<2x8x32xf32>
    %17 = arith.mulf %13, %16 : vector<2x8x32xf32>
    %cst_12 = arith.constant dense<0.000000e+00> : vector<2x8xf32>
    %18 = vector.multi_reduction <add>, %17, %cst_12 [2] : vector<2x8x32xf32> to vector<2x8xf32>
    %cst_13 = arith.constant dense<0xFF800000> : vector<2xf32>
    %19 = vector.multi_reduction <maximumf>, %18, %cst_13 [1] : vector<2x8xf32> to vector<2xf32>
    %20 = vector.shape_cast %19 : vector<2xf32> to vector<2x1xf32>
    %21 = vector.broadcast %20 : vector<2x1xf32> to vector<2x8xf32>
    %22 = arith.subf %18, %21 : vector<2x8xf32>
    %23 = math.exp %22 : vector<2x8xf32>
    %cst_14 = arith.constant dense<0.000000e+00> : vector<2xf32>
    %24 = vector.multi_reduction <add>, %23, %cst_14 [1] : vector<2x8xf32> to vector<2xf32>
    %25 = vector.shape_cast %24 : vector<2xf32> to vector<2x1xf32>
    %26 = tpu.reciprocal %25 {approx = true} : vector<2x1xf32> -> vector<2x1xf32>
    %27 = vector.broadcast %26 : vector<2x1xf32> to vector<2x8xf32>
    %28 = arith.mulf %23, %27 : vector<2x8xf32>
    %c0_15 = arith.constant 0 : index
    %c0_16 = arith.constant 0 : index
    %29 = vector.load %arg13[%c0_15, %c0_16] : memref<2x8xf32, #tpu.memory_space<vmem>>, vector<2x8xf32>
    tpu.vector_store %arg13[%c0_15, %c0_16], %28 {strides = array<i32>} : memref<2x8xf32, #tpu.memory_space<vmem>>, vector<2x8xf32>,
    %30 = vector.shape_cast %28 : vector<2x8xf32> to vector<2x1x8xf32>
    %c0_17 = arith.constant 0 : index
    %c0_18 = arith.constant 0 : index
    %c0_19 = arith.constant 0 : index
    %31 = vector.load %arg4[%c0_17, %c0_18, %c0_19] : memref<2x8x32xf32, #tpu.memory_space<vmem>>, vector<2x8x32xf32>
    "tpu.trace_start"() <{level = 10 : i32, message = "bqt,btd->bqd"}> : () -> ()
    %cst_20 = arith.constant dense<0.000000e+00> : vector<2x1x32xf32>
    %32 = tpu.matmul %30, %31, %cst_20 {dimension_numbers = #tpu.dot_dimension_numbers<[2], [1], [1], [2], [0, 0, 0, 1, 1, 2], [0], [0]>} : vector<2x1x8xf32>, vector<2x8x32xf32>, vector<2x1x32xf32> -> vector<2x1x32xf32>
    "tpu.trace_stop"() : () -> ()
    %33 = vector.shape_cast %32 : vector<2x1x32xf32> to vector<2x32xf32>
    %c0_21 = arith.constant 0 : index
    %c0_22 = arith.constant 0 : index
    %34 = vector.load %arg9[%c0_21, %c0_22] : memref<32x128xf32, #tpu.memory_space<vmem>>, vector<32x128xf32>
    %cst_23 = arith.constant dense<0.000000e+00> : vector<2x128xf32>
    %35 = tpu.matmul %33, %34, %cst_23 {dimension_numbers = #tpu.dot_dimension_numbers<[1], [0], [0], [1], [0, 0, 1, 1], [], []>} : vector<2x32xf32>, vector<32x128xf32>, vector<2x128xf32> -> vector<2x128xf32>
    %36 = arith.addf %35, %8 : vector<2x128xf32>
    %c0_24 = arith.constant 0 : index
    %c0_25 = arith.constant 0 : index
    %37 = vector.load %arg5[%c0_24, %c0_25] : memref<2x128xf32, #tpu.memory_space<vmem>>, vector<2x128xf32>
    %38 = arith.addf %36, %37 : vector<2x128xf32>
    %c0_26 = arith.constant 0 : index
    %c0_27 = arith.constant 0 : index
    %39 = vector.load %arg10[%c0_26, %c0_27] : memref<1x128xf32, #tpu.memory_space<vmem>>, vector<1x128xf32>
    %40 = vector.broadcast %39 : vector<1x128xf32> to vector<2x128xf32>
    %41 = arith.addf %38, %40 : vector<2x128xf32>
    %42 = vector.extract_strided_slice %41 {offsets = [0, 0], sizes = [2, 32], strides = [1, 1]} : vector<2x128xf32> to vector<2x32xf32>
    %43 = arith.negf %42 : vector<2x32xf32>
    %44 = math.exp %43 : vector<2x32xf32>
    %cst_28 = arith.constant 1.000000e+00 : f32
    %45 = vector.broadcast %cst_28 : f32 to vector<2x32xf32>
    %46 = arith.addf %45, %44 : vector<2x32xf32>
    %47 = arith.divf %45, %46 : vector<2x32xf32>
    %48 = vector.extract_strided_slice %41 {offsets = [0, 32], sizes = [2, 32], strides = [1, 1]} : vector<2x128xf32> to vector<2x32xf32>
    %49 = arith.negf %48 : vector<2x32xf32>
    %50 = math.exp %49 : vector<2x32xf32>
    %cst_29 = arith.constant 1.000000e+00 : f32
    %51 = vector.broadcast %cst_29 : f32 to vector<2x32xf32>
    %52 = arith.addf %51, %50 : vector<2x32xf32>
    %53 = arith.divf %51, %52 : vector<2x32xf32>
    %54 = vector.extract_strided_slice %41 {offsets = [0, 64], sizes = [2, 32], strides = [1, 1]} : vector<2x128xf32> to vector<2x32xf32>
    %55 = math.tanh %54 : vector<2x32xf32>
    %56 = vector.extract_strided_slice %41 {offsets = [0, 96], sizes = [2, 32], strides = [1, 1]} : vector<2x128xf32> to vector<2x32xf32>
    %57 = arith.negf %56 : vector<2x32xf32>
    %58 = math.exp %57 : vector<2x32xf32>
    %cst_30 = arith.constant 1.000000e+00 : f32
    %59 = vector.broadcast %cst_30 : f32 to vector<2x32xf32>
    %60 = arith.addf %59, %58 : vector<2x32xf32>
    %61 = arith.divf %59, %60 : vector<2x32xf32>
    %62 = arith.mulf %53, %1 : vector<2x32xf32>
    %63 = arith.mulf %47, %55 : vector<2x32xf32>
    %64 = arith.addf %62, %63 : vector<2x32xf32>
    %65 = math.tanh %64 : vector<2x32xf32>
    %66 = arith.mulf %61, %65 : vector<2x32xf32>
    %c0_31 = arith.constant 0 : index
    %c0_32 = arith.constant 0 : index
    %67 = vector.load %arg11[%c0_31, %c0_32] : memref<2x32xf32, #tpu.memory_space<vmem>>, vector<2x32xf32>
    tpu.vector_store %arg11[%c0_31, %c0_32], %66 {strides = array<i32>} : memref<2x32xf32, #tpu.memory_space<vmem>>, vector<2x32xf32>,
    %c0_33 = arith.constant 0 : index
    %c0_34 = arith.constant 0 : index
    %68 = vector.load %arg12[%c0_33, %c0_34] : memref<2x32xf32, #tpu.memory_space<vmem>>, vector<2x32xf32>
    tpu.vector_store %arg12[%c0_33, %c0_34], %64 {strides = array<i32>} : memref<2x32xf32, #tpu.memory_space<vmem>>, vector<2x32xf32>,
    return
  }
  func.func @transform_0(%arg0: i32) -> (i32, i32) {
    %c0_i32 = arith.constant 0 : i32
    %c0_i32_0 = arith.constant 0 : i32
    return %arg0, %c0_i32 : i32, i32
  }
  func.func @transform_1(%arg0: i32) -> (i32, i32) {
    %c0_i32 = arith.constant 0 : i32
    %c0_i32_0 = arith.constant 0 : i32
    return %arg0, %c0_i32 : i32, i32
  }
  func.func @transform_2(%arg0: i32) -> (i32, i32, i32) {
    %c0_i32 = arith.constant 0 : i32
    %c0_i32_0 = arith.constant 0 : i32
    %c0_i32_1 = arith.constant 0 : i32
    return %arg0, %c0_i32, %c0_i32_0 : i32, i32, i32
  }
  func.func @transform_3(%arg0: i32) -> (i32, i32, i32) {
    %c0_i32 = arith.constant 0 : i32
    %c0_i32_0 = arith.constant 0 : i32
    %c0_i32_1 = arith.constant 0 : i32
    return %arg0, %c0_i32, %c0_i32_0 : i32, i32, i32
  }
  func.func @transform_4(%arg0: i32) -> (i32, i32) {
    %c0_i32 = arith.constant 0 : i32
    %c0_i32_0 = arith.constant 0 : i32
    return %arg0, %c0_i32 : i32, i32
  }
  func.func @transform_5(%arg0: i32) -> (i32, i32) {
    %c0_i32 = arith.constant 0 : i32
    %c0_i32_0 = arith.constant 0 : i32
    %c0_i32_1 = arith.constant 0 : i32
    return %c0_i32, %c0_i32_0 : i32, i32
  }
  func.func @transform_6(%arg0: i32) -> (i32, i32) {
    %c0_i32 = arith.constant 0 : i32
    %c0_i32_0 = arith.constant 0 : i32
    %c0_i32_1 = arith.constant 0 : i32
    return %c0_i32, %c0_i32_0 : i32, i32
  }
  func.func @transform_7(%arg0: i32) -> (i32, i32) {
    %c0_i32 = arith.constant 0 : i32
    %c0_i32_0 = arith.constant 0 : i32
    %c0_i32_1 = arith.constant 0 : i32
    return %c0_i32, %c0_i32_0 : i32, i32
  }
  func.func @transform_8(%arg0: i32) -> (i32, i32) {
    %c0_i32 = arith.constant 0 : i32
    %c0_i32_0 = arith.constant 0 : i32
    %c0_i32_1 = arith.constant 0 : i32
    return %c0_i32, %c0_i32_0 : i32, i32
  }
  func.func @transform_9(%arg0: i32) -> (i32, i32) {
    %c0_i32 = arith.constant 0 : i32
    %c0_i32_0 = arith.constant 0 : i32
    %c0_i32_1 = arith.constant 0 : i32
    return %c0_i32, %c0_i32_0 : i32, i32
  }
  func.func @transform_10(%arg0: i32) -> (i32, i32) {
    %c0_i32 = arith.constant 0 : i32
    %c0_i32_0 = arith.constant 0 : i32
    return %arg0, %c0_i32 : i32, i32
  }
  func.func @transform_11(%arg0: i32) -> (i32, i32) {
    %c0_i32 = arith.constant 0 : i32
    %c0_i32_0 = arith.constant 0 : i32
    return %arg0, %c0_i32 : i32, i32
  }
  func.func @transform_12(%arg0: i32) -> (i32, i32) {
    %c0_i32 = arith.constant 0 : i32
    %c0_i32_0 = arith.constant 0 : i32
    return %arg0, %c0_i32 : i32, i32
  }
}

</mosaic_0001>

<llo_original>
// kernel: attention_cell_1d.1
$region0: #{attention_cell_1d.1}
  #allocation0 [shape = 'u32[]', space=smem, size = 0x4, offset = 0x4, fixed_abs, tag = 'smem constant byte address 0x4 - core index']
  #allocation1 [shape = 'u32[144,128]{1,0:T(1,128)}', space=vmem, size = 0x12000, scoped, tag = 'internal scratch']
  %s0 = inlined_call_operand.vmem [shape: f32[2,32], index: 0, kind: input, shape index: {}, may-alias: {0,10}]
  %s1 = inlined_call_operand.vmem [shape: f32[2,32], index: 1, kind: input, shape index: {}, may-alias: {1,11}]
  %s2 = inlined_call_operand.vmem [shape: f32[2,8,32], index: 2, kind: input, shape index: {}]
  %s3 = inlined_call_operand.vmem [shape: f32[2,8,32], index: 3, kind: input, shape index: {}]
  %s4 = inlined_call_operand.vmem [shape: f32[2,128], index: 4, kind: input, shape index: {}]
  %s5 = inlined_call_operand.vmem [shape: f32[32,160], index: 5, kind: input, shape index: {}]
  %s6 = inlined_call_operand.vmem [shape: f32[1,32], index: 6, kind: input, shape index: {}]
  %s7 = inlined_call_operand.vmem [shape: f32[1,32], index: 7, kind: input, shape index: {}]
  %s8 = inlined_call_operand.vmem [shape: f32[32,128], index: 8, kind: input, shape index: {}]
  %s9 = inlined_call_operand.vmem [shape: f32[1,128], index: 9, kind: input, shape index: {}]
  %s10 = inlined_call_operand.vmem [shape: f32[2,32], index: 10, kind: output, shape index: {0}, may-alias: {0,10}]
  %s11 = inlined_call_operand.vmem [shape: f32[2,32], index: 11, kind: output, shape index: {1}, may-alias: {1,11}]
  %s12 = inlined_call_operand.hbm [shape: f32[2,8], index: 12, kind: output, shape index: {2}]
  %13 = xla_tuple %s10, %s11, %s12
  %s14 = sld [smem:[#allocation0]]
  $region66: #{attention_cell_1d.1} parent=0
    _
  %s16 = ssub.s32 1, %s14
  %s17 = scalar_select 0, %s16, %s14
  $region1: #{attention_cell_1d.1} parent=0
    #allocation2 [shape = 'u8[1024]{0}', space=vmem, size = 0x400, scoped, tag = 'output window, operand 2, single buffered']
    #allocation3 [shape = 's32[1]{0}', space=sflag, size = 0x4, scoped, tag = 'scoped memory for attention_cell_1d.1']
    %18 = vsyncpa [#allocation3], 0
    // Predicated region
    $region2: #{attention_cell_1d.1} parent=1 // pred_check
      _
    $region3: #{attention_cell_1d.1} parent=1 // pred_check_branch
      %20 = sbr.rel (0) target = $region5
    $region4: #{attention_cell_1d.1} parent=1 // pred_region
      _
    $region5: #{attention_cell_1d.1} parent=1 // pred_fallthru
      _
    // Predicated region
    $region6: #{attention_cell_1d.1} parent=1 // pred_check
      _
    $region7: #{attention_cell_1d.1} parent=1 // pred_check_branch
      %22 = sbr.rel (0) target = $region9
    $region8: #{attention_cell_1d.1} parent=1 // pred_region
      _
    $region9: #{attention_cell_1d.1} parent=1 // pred_fallthru
      _
    // Predicated region
    $region10: #{attention_cell_1d.1} parent=1 // pred_check
      _
    $region11: #{attention_cell_1d.1} parent=1 // pred_check_branch
      %24 = sbr.rel (0) target = $region13
    $region12: #{attention_cell_1d.1} parent=1 // pred_region
      _
    $region13: #{attention_cell_1d.1} parent=1 // pred_fallthru
      _
    // Predicated region
    $region14: #{attention_cell_1d.1} parent=1 // pred_check
      _
    $region15: #{attention_cell_1d.1} parent=1 // pred_check_branch
      %26 = sbr.rel (0) target = $region17
    $region16: #{attention_cell_1d.1} parent=1 // pred_region
      _
    $region17: #{attention_cell_1d.1} parent=1 // pred_fallthru
      _
    // Predicated region
    $region18: #{attention_cell_1d.1} parent=1 // pred_check
      _
    $region19: #{attention_cell_1d.1} parent=1 // pred_check_branch
      %28 = sbr.rel (0) target = $region21
    $region20: #{attention_cell_1d.1} parent=1 // pred_region
      _
    $region21: #{attention_cell_1d.1} parent=1 // pred_fallthru
      _
    // Predicated region
    $region22: #{attention_cell_1d.1} parent=1 // pred_check
      _
    $region23: #{attention_cell_1d.1} parent=1 // pred_check_branch
      %30 = sbr.rel (0) target = $region25
    $region24: #{attention_cell_1d.1} parent=1 // pred_region
      _
    $region25: #{attention_cell_1d.1} parent=1 // pred_fallthru
      _
    // Predicated region
    $region26: #{attention_cell_1d.1} parent=1 // pred_check
      _
    $region27: #{attention_cell_1d.1} parent=1 // pred_check_branch
      %32 = sbr.rel (0) target = $region29
    $region28: #{attention_cell_1d.1} parent=1 // pred_region
      _
    $region29: #{attention_cell_1d.1} parent=1 // pred_fallthru
      _
    // Predicated region
    $region30: #{attention_cell_1d.1} parent=1 // pred_check
      _
    $region31: #{attention_cell_1d.1} parent=1 // pred_check_branch
      %34 = sbr.rel (0) target = $region33
    $region32: #{attention_cell_1d.1} parent=1 // pred_region
      _
    $region33: #{attention_cell_1d.1} parent=1 // pred_fallthru
      _
    // Predicated region
    $region34: #{attention_cell_1d.1} parent=1 // pred_check
      _
    $region35: #{attention_cell_1d.1} parent=1 // pred_check_branch
      %36 = sbr.rel (0) target = $region37
    $region36: #{attention_cell_1d.1} parent=1 // pred_region
      _
    $region37: #{attention_cell_1d.1} parent=1 // pred_fallthru
      _
    // Predicated region
    $region38: #{attention_cell_1d.1} parent=1 // pred_check
      _
    $region39: #{attention_cell_1d.1} parent=1 // pred_check_branch
      %38 = sbr.rel (0) target = $region41
    $region40: #{attention_cell_1d.1} parent=1 // pred_region
      _
    $region41: #{attention_cell_1d.1} parent=1 // pred_fallthru
      _
    %v39 = vld [vmem:[%s0] sm:$0x3]
    %v40 = vld [vmem:[%s1] sm:$0x3]
    %v41 = vld [vmem:[%s5] sm:$0xff]
    %v42 = vld [vmem:[%s5 + $0x8] sm:$0xff]
    %v43 = vld [vmem:[%s5 + $0x10] sm:$0xff]
    %v44 = vld [vmem:[%s5 + $0x18] sm:$0xff]
    %v45 = vld [vmem:[%s5 + $0x20] sm:$0xff]
    %v46 = vld [vmem:[%s5 + $0x28] sm:$0xff]
    %v47 = vld [vmem:[%s5 + $0x30] sm:$0xff]
    %v48 = vld [vmem:[%s5 + $0x38] sm:$0xff]
    %vm49 = vcmask 261120
    %v51 = vsel %vm49, %v39, 0
    %53 = vmatprep.subr.mxu0 %v42
    %54 = vmatpush1.msra.mxu0 %v41
    %55 = vmatprep.subr.mxu0 %v44
    %56 = vmatpush1.msra.mxu0 %v43
    %57 = vmatprep.subr.mxu0 %v46
    %58 = vmatpush1.msra.mxu0 %v45
    %59 = vmatprep.subr.mxu0 %v48
    %60 = vmatpush1.msra.mxu0 %v47
    %61 = vmatprep.subr.mxu0 0.0
    %62 = vmatpush1.msra.mxu0 0.0
    %63 = vmatprep.subr.mxu0 0.0
    %64 = vmatpush1.msra.mxu0 0.0
    %65 = vmatprep.subr.mxu0 0.0
    %66 = vmatpush1.msra.mxu0 0.0
    %67 = vmatprep.subr.mxu0 0.0
    %68 = vmatpush1.msra.mxu0 0.0
    %69 = vmatprep.subr.mxu0 0.0
    %70 = vmatpush1.msra.mxu0 0.0
    %71 = vmatprep.subr.mxu0 0.0
    %72 = vmatpush1.msra.mxu0 0.0
    %73 = vmatprep.subr.mxu0 0.0
    %74 = vmatpush1.msra.mxu0 0.0
    %75 = vmatprep.subr.mxu0 0.0
    %76 = vmatpush1.msra.mxu0 0.0
    %77 = vmatprep.subr.mxu0 0.0
    %78 = vmatpush1.msra.mxu0 0.0
    %79 = vmatprep.subr.mxu0 0.0
    %80 = vmatpush1.msra.mxu0 0.0
    %81 = vmatprep.subr.mxu0 0.0
    %82 = vmatpush1.msra.mxu0 0.0
    %83 = vmatprep.subr.mxu0 0.0
    %84 = vmatpush1.msra.mxu0 0.0
    %85 = vmatprep.subr.mxu0 0.0
    %86 = vmatpush1.msra.mxu0 0.0
    %87 = vmatprep.subr.mxu0 0.0
    %88 = vmatpush1.msra.mxu0 0.0
    %89 = vmatprep.subr.mxu0 0.0
    %90 = vmatpush1.msra.mxu0 0.0
    %91 = vmatprep.subr.mxu0 0.0
    %92 = vmatpush1.msra.mxu0 0.0
    %93 = vmatprep.subr.mxu0 0.0
    %94 = vmatpush1.msra.mxu0 0.0
    %95 = vmatprep.subr.mxu0 0.0
    %96 = vmatpush1.msra.mxu0 0.0
    %97 = vmatprep.subr.mxu0 0.0
    %98 = vmatpush1.msra.mxu0 0.0
    %99 = vmatprep.subr.mxu0 0.0
    %100 = vmatpush1.msra.mxu0 0.0
    %101 = vmatprep.subr.mxu0 0.0
    %102 = vmatpush1.msra.mxu0 0.0
    %103 = vmatprep.subr.mxu0 0.0
    %104 = vmatpush1.msra.mxu0 0.0
    %105 = vmatprep.subr.mxu0 0.0
    %106 = vmatpush1.msra.mxu0 0.0
    %107 = vmatprep.subr.mxu0 0.0
    %108 = vmatpush1.msra.mxu0 0.0
    %109 = vmatprep.subr.mxu0 0.0
    %110 = vmatpush1.msra.mxu0 0.0
    %111 = vmatprep.subr.mxu0 0.0
    %112 = vmatpush1.msra.mxu0 0.0
    %113 = vmatprep.subr.mxu0 0.0
    %114 = vmatpush1.msra.mxu0 0.0
    %115 = vmatprep.subr.mxu0 0.0
    %116 = vmatpush1.msra.mxu0 0.0
    %117 = vmatprep.mubr.f32.mxu0 0.0
    %118 = vmatmul.mubr.f32.gmra.mrb[0].mxu0 %v51
    %v119 = vpop.f32.mrb[0].mxu0
    %v120 = vadd.f32 0.0, %v119
    %v121 = vpop.f32.mrb[0].mxu0
    %v122 = vadd.f32 0.0, %v121
    %123 = vdwg.mxu0
    %v124 = vld [vmem:[%s6] sm:$0x1]
    %v126 = vlaneseq
    %v127 = vshrl.u32 %v126, 7
    %v128 = vsub.s32 0, %v127
    %v129 = vrot.slane %v124, %v128
    %v131 = vadd.f32 %v120, %v129
    %v132 = vld [vmem:[%s2] sm:$0xff]
    %v133 = vld [vmem:[%s2 + $0x8] sm:$0xff]
    %v136 = vunpack.c.l.s4 1966171168
    %v137 = vunpack.c.0.s8 %v136
    %v138 = vlaneseq
    %v139 = vshrl.u32 %v138, 7
    %v140 = vsub.s32 %v137, %v139
    %v141 = vrot.slane %v131, %v140
    %v142 = vcombine.high %v141, %v141
    %v144 = vunpack.c.l.s4 1966171168
    %v145 = vunpack.c.0.s8 %v144
    %v146 = vlaneseq
    %v147 = vshrl.u32 %v146, 7
    %v148 = vsub.s32 %v145, %v147
    %v149 = vrot.slane %v141, %v148
    %v151 = vunpack.c.l.s4 1966171168
    %v152 = vunpack.c.0.s8 %v151
    %v153 = vlaneseq
    %v154 = vshrl.u32 %v153, 7
    %v155 = vsub.s32 %v152, %v154
    %v156 = vrot.slane %v142, %v155
    %v157 = vlaneseq
    %v158 = vshrl.u32 %v157, 7
    %v159 = vsub.s32 0, %v158
    %v160 = vrot.slane %v149, %v159
    %v161 = vlaneseq
    %v162 = vshrl.u32 %v161, 7
    %v163 = vsub.s32 0, %v162
    %v164 = vrot.slane %v156, %v163
    %v167 = vadd.f32 %v132, %v160
    %v168 = vadd.f32 %v133, %v164
    %v169 = vtanh.pop %v167
    %v170 = vtanh.pop %v168
    %v171 = vld [vmem:[%s7] sm:$0x1]
    %v173 = vlaneseq
    %v174 = vshrl.u32 %v173, 7
    %v175 = vsub.s32 0, %v174
    %v176 = vrot.slane %v171, %v175
    %v178 = vmul.f32 %v169, %v176
    %v179 = vmul.f32 %v170, %v176
    %v180 = vsel %vm49, %v178, 0.0
    %181 = vadd.xlane.f32.xlu0 %v180
    %v182 = vpop.xlane.xlu0 %181
    %v183 = vsel %vm49, %v179, 0.0
    %184 = vadd.xlane.f32.xlu0 %v183
    %v185 = vpop.xlane.xlu0 %184
    %v188 = vlaneseq
    %v189 = vand.u32 %v188, 127
    %v190 = vlaneseq
    %v191 = vshrl.u32 %v190, 7
    %v192 = vsub.s32 %v189, %v191
    %v193 = vrot.slane %v182, %v192
    %v194 = vlaneseq
    %v195 = vshrl.u32 %v194, 7
    %v196 = vsub.s32 %v189, %v195
    %v197 = vrot.slane %v185, %v196
    %vm198 = vcmask 1041409
    %v199 = vsel %vm198, %v197, %v193
    %vm201 = vcmask 58368
    %v202 = vsel %vm201, %v199, -inf
    %203 = vmax.xlane.f32.xlu0 %v202
    %v204 = vpop.xlane.xlu0 %203
    %v206 = vlaneseq
    %v207 = vshrl.u32 %v206, 7
    %v208 = vsub.s32 0, %v207
    %v209 = vrot.slane %v204, %v208
    %v210 = vlaneseq
    %v211 = vshrl.u32 %v210, 7
    %v212 = vsub.s32 1, %v211
    %v213 = vrot.slane %v204, %v212
    %v216 = vsub.f32 %v182, %v209
    %v217 = vsub.f32 %v185, %v213
    %v218 = vmul.f32 %v216, 1.442695
    %v219 = vpow.pop %v218
    %v220 = vmul.f32 %v217, 1.442695
    %v221 = vpow.pop %v220
    %224 = vset.pattern.permute.xlu0 0
    %225 = vperm.xlu0 %224, %v219
    %v226 = vpop.permute.xlu0 %225
    %227 = vset.pattern.permute.xlu0 0
    %228 = vperm.xlu0 %227, %v221
    %v229 = vpop.permute.xlu0 %228
    %v230 = vlaneseq
    %v231 = vshrl.u32 %v230, 7
    %v232 = vsub.s32 %v189, %v231
    %v233 = vrot.slane %v226, %v232
    %v234 = vlaneseq
    %v235 = vshrl.u32 %v234, 7
    %v236 = vsub.s32 %v189, %v235
    %v237 = vrot.slane %v229, %v236
    %v238 = vsel %vm198, %v237, %v233
    %v240 = vsel %vm201, %v238, 0.0
    %241 = vadd.xlane.f32.xlu0 %v240
    %v242 = vpop.xlane.xlu0 %241
    %v243 = vrcp.pop %v242
    %v245 = vlaneseq
    %v246 = vshrl.u32 %v245, 7
    %v247 = vsub.s32 0, %v246
    %v248 = vrot.slane %v243, %v247
    %v249 = vlaneseq
    %v250 = vshrl.u32 %v249, 7
    %v251 = vsub.s32 1, %v250
    %v252 = vrot.slane %v243, %v251
    %v255 = vmul.f32 %v219, %v248
    %v256 = vmul.f32 %v221, %v252
    %259 = vset.pattern.permute.xlu0 0
    %260 = vperm.xlu0 %259, %v255
    %v261 = vpop.permute.xlu0 %260
    %262 = vset.pattern.permute.xlu0 0
    %263 = vperm.xlu0 %262, %v256
    %v264 = vpop.permute.xlu0 %263
    %v265 = vlaneseq
    %v266 = vshrl.u32 %v265, 7
    %v267 = vsub.s32 %v189, %v266
    %v268 = vrot.slane %v261, %v267
    %v269 = vlaneseq
    %v270 = vshrl.u32 %v269, 7
    %v271 = vsub.s32 %v189, %v270
    %v272 = vrot.slane %v264, %v271
    %v273 = vsel %vm198, %v272, %v268
    %275 = vst.msk [vmem:[#allocation2] sm:$0x3] %vm201, %v273
    %v276 = vld [vmem:[%s3] sm:$0xff]
    %v277 = vld [vmem:[%s3 + $0x8] sm:$0xff]
    %vm278 = vcmask 64512
    %v279 = vsel %vm278, %v268, 0
    %281 = vmatprep.subr.mxu0 0.0
    %282 = vmatpush1.msra.mxu0 %v276
    %283 = vmatprep.subr.mxu0 0.0
    %284 = vmatpush1.msra.mxu0 0.0
    %285 = vmatprep.subr.mxu0 0.0
    %286 = vmatpush1.msra.mxu0 0.0
    %287 = vmatprep.subr.mxu0 0.0
    %288 = vmatpush1.msra.mxu0 0.0
    %289 = vmatprep.subr.mxu0 0.0
    %290 = vmatpush1.msra.mxu0 0.0
    %291 = vmatprep.subr.mxu0 0.0
    %292 = vmatpush1.msra.mxu0 0.0
    %293 = vmatprep.subr.mxu0 0.0
    %294 = vmatpush1.msra.mxu0 0.0
    %295 = vmatprep.subr.mxu0 0.0
    %296 = vmatpush1.msra.mxu0 0.0
    %297 = vmatprep.subr.mxu0 0.0
    %298 = vmatpush1.msra.mxu0 0.0
    %299 = vmatprep.subr.mxu0 0.0
    %300 = vmatpush1.msra.mxu0 0.0
    %301 = vmatprep.subr.mxu0 0.0
    %302 = vmatpush1.msra.mxu0 0.0
    %303 = vmatprep.subr.mxu0 0.0
    %304 = vmatpush1.msra.mxu0 0.0
    %305 = vmatprep.subr.mxu0 0.0
    %306 = vmatpush1.msra.mxu0 0.0
    %307 = vmatprep.subr.mxu0 0.0
    %308 = vmatpush1.msra.mxu0 0.0
    %309 = vmatprep.subr.mxu0 0.0
    %310 = vmatpush1.msra.mxu0 0.0
    %311 = vmatprep.subr.mxu0 0.0
    %312 = vmatpush1.msra.mxu0 0.0
    %313 = vmatprep.subr.mxu0 0.0
    %314 = vmatpush1.msra.mxu0 0.0
    %315 = vmatprep.subr.mxu0 0.0
    %316 = vmatpush1.msra.mxu0 0.0
    %317 = vmatprep.subr.mxu0 0.0
    %318 = vmatpush1.msra.mxu0 0.0
    %319 = vmatprep.subr.mxu0 0.0
    %320 = vmatpush1.msra.mxu0 0.0
    %321 = vmatprep.subr.mxu0 0.0
    %322 = vmatpush1.msra.mxu0 0.0
    %323 = vmatprep.subr.mxu0 0.0
    %324 = vmatpush1.msra.mxu0 0.0
    %325 = vmatprep.subr.mxu0 0.0
    %326 = vmatpush1.msra.mxu0 0.0
    %327 = vmatprep.subr.mxu0 0.0
    %328 = vmatpush1.msra.mxu0 0.0
    %329 = vmatprep.subr.mxu0 0.0
    %330 = vmatpush1.msra.mxu0 0.0
    %331 = vmatprep.subr.mxu0 0.0
    %332 = vmatpush1.msra.mxu0 0.0
    %333 = vmatprep.subr.mxu0 0.0
    %334 = vmatpush1.msra.mxu0 0.0
    %335 = vmatprep.subr.mxu0 0.0
    %336 = vmatpush1.msra.mxu0 0.0
    %337 = vmatprep.subr.mxu0 0.0
    %338 = vmatpush1.msra.mxu0 0.0
    %339 = vmatprep.subr.mxu0 0.0
    %340 = vmatpush1.msra.mxu0 0.0
    %341 = vmatprep.subr.mxu0 0.0
    %342 = vmatpush1.msra.mxu0 0.0
    %343 = vmatprep.subr.mxu0 0.0
    %344 = vmatpush1.msra.mxu0 0.0
    %345 = vmatprep.mubr.f32.mxu0 0.0
    %346 = vmatmul.mubr.f32.gmra.mrb[0].mxu0 %v279
    %v347 = vpop.f32.mrb[0].mxu0
    %v348 = vadd.f32 0.0, %v347
    %v349 = vpop.f32.mrb[0].mxu0
    %350 = vdwg.mxu0
    %v351 = vsel %vm278, %v272, 0
    %353 = vmatprep.subr.mxu0 0.0
    %354 = vmatpush1.msra.mxu0 %v277
    %355 = vmatprep.subr.mxu0 0.0
    %356 = vmatpush1.msra.mxu0 0.0
    %357 = vmatprep.subr.mxu0 0.0
    %358 = vmatpush1.msra.mxu0 0.0
    %359 = vmatprep.subr.mxu0 0.0
    %360 = vmatpush1.msra.mxu0 0.0
    %361 = vmatprep.subr.mxu0 0.0
    %362 = vmatpush1.msra.mxu0 0.0
    %363 = vmatprep.subr.mxu0 0.0
    %364 = vmatpush1.msra.mxu0 0.0
    %365 = vmatprep.subr.mxu0 0.0
    %366 = vmatpush1.msra.mxu0 0.0
    %367 = vmatprep.subr.mxu0 0.0
    %368 = vmatpush1.msra.mxu0 0.0
    %369 = vmatprep.subr.mxu0 0.0
    %370 = vmatpush1.msra.mxu0 0.0
    %371 = vmatprep.subr.mxu0 0.0
    %372 = vmatpush1.msra.mxu0 0.0
    %373 = vmatprep.subr.mxu0 0.0
    %374 = vmatpush1.msra.mxu0 0.0
    %375 = vmatprep.subr.mxu0 0.0
    %376 = vmatpush1.msra.mxu0 0.0
    %377 = vmatprep.subr.mxu0 0.0
    %378 = vmatpush1.msra.mxu0 0.0
    %379 = vmatprep.subr.mxu0 0.0
    %380 = vmatpush1.msra.mxu0 0.0
    %381 = vmatprep.subr.mxu0 0.0
    %382 = vmatpush1.msra.mxu0 0.0
    %383 = vmatprep.subr.mxu0 0.0
    %384 = vmatpush1.msra.mxu0 0.0
    %385 = vmatprep.subr.mxu0 0.0
    %386 = vmatpush1.msra.mxu0 0.0
    %387 = vmatprep.subr.mxu0 0.0
    %388 = vmatpush1.msra.mxu0 0.0
    %389 = vmatprep.subr.mxu0 0.0
    %390 = vmatpush1.msra.mxu0 0.0
    %391 = vmatprep.subr.mxu0 0.0
    %392 = vmatpush1.msra.mxu0 0.0
    %393 = vmatprep.subr.mxu0 0.0
    %394 = vmatpush1.msra.mxu0 0.0
    %395 = vmatprep.subr.mxu0 0.0
    %396 = vmatpush1.msra.mxu0 0.0
    %397 = vmatprep.subr.mxu0 0.0
    %398 = vmatpush1.msra.mxu0 0.0
    %399 = vmatprep.subr.mxu0 0.0
    %400 = vmatpush1.msra.mxu0 0.0
    %401 = vmatprep.subr.mxu0 0.0
    %402 = vmatpush1.msra.mxu0 0.0
    %403 = vmatprep.subr.mxu0 0.0
    %404 = vmatpush1.msra.mxu0 0.0
    %405 = vmatprep.subr.mxu0 0.0
    %406 = vmatpush1.msra.mxu0 0.0
    %407 = vmatprep.subr.mxu0 0.0
    %408 = vmatpush1.msra.mxu0 0.0
    %409 = vmatprep.subr.mxu0 0.0
    %410 = vmatpush1.msra.mxu0 0.0
    %411 = vmatprep.subr.mxu0 0.0
    %412 = vmatpush1.msra.mxu0 0.0
    %413 = vmatprep.subr.mxu0 0.0
    %414 = vmatpush1.msra.mxu0 0.0
    %415 = vmatprep.subr.mxu0 0.0
    %416 = vmatpush1.msra.mxu0 0.0
    %417 = vmatprep.mubr.f32.mxu0 0.0
    %418 = vmatmul.mubr.f32.gmra.mrb[0].mxu0 %v351
    %v419 = vpop.f32.mrb[0].mxu0
    %v420 = vadd.f32 0.0, %v419
    %v421 = vpop.f32.mrb[0].mxu0
    %422 = vdwg.mxu0
    %v423 = vld [vmem:[%s8] sm:$0xff]
    %v424 = vld [vmem:[%s8 + $0x8] sm:$0xff]
    %v425 = vld [vmem:[%s8 + $0x10] sm:$0xff]
    %v426 = vld [vmem:[%s8 + $0x18] sm:$0xff]
    %v429 = vrot.slane %v420, 7
    %v430 = vsel %vm198, %v429, %v348
    %433 = vrot.lane.b32.xlu0 %v120, 96
    %v434 = vpop.permute.xlu0 %433
    %435 = vrot.lane.b32.xlu0 %v122, 96
    %v436 = vpop.permute.xlu0 %435
    %vm437 = vcmask 785408
    %v438 = vsel %vm437, %v434, %v436
    %v440 = vsel %vm49, %v430, 0
    %442 = vmatprep.subr.mxu0 0.0
    %443 = vmatpush1.msra.mxu0 %v423
    %444 = vmatprep.subr.mxu0 0.0
    %445 = vmatpush1.msra.mxu0 %v424
    %446 = vmatprep.subr.mxu0 0.0
    %447 = vmatpush1.msra.mxu0 %v425
    %448 = vmatprep.subr.mxu0 0.0
    %449 = vmatpush1.msra.mxu0 %v426
    %450 = vmatprep.subr.mxu0 0.0
    %451 = vmatpush1.msra.mxu0 0.0
    %452 = vmatprep.subr.mxu0 0.0
    %453 = vmatpush1.msra.mxu0 0.0
    %454 = vmatprep.subr.mxu0 0.0
    %455 = vmatpush1.msra.mxu0 0.0
    %456 = vmatprep.subr.mxu0 0.0
    %457 = vmatpush1.msra.mxu0 0.0
    %458 = vmatprep.subr.mxu0 0.0
    %459 = vmatpush1.msra.mxu0 0.0
    %460 = vmatprep.subr.mxu0 0.0
    %461 = vmatpush1.msra.mxu0 0.0
    %462 = vmatprep.subr.mxu0 0.0
    %463 = vmatpush1.msra.mxu0 0.0
    %464 = vmatprep.subr.mxu0 0.0
    %465 = vmatpush1.msra.mxu0 0.0
    %466 = vmatprep.subr.mxu0 0.0
    %467 = vmatpush1.msra.mxu0 0.0
    %468 = vmatprep.subr.mxu0 0.0
    %469 = vmatpush1.msra.mxu0 0.0
    %470 = vmatprep.subr.mxu0 0.0
    %471 = vmatpush1.msra.mxu0 0.0
    %472 = vmatprep.subr.mxu0 0.0
    %473 = vmatpush1.msra.mxu0 0.0
    %474 = vmatprep.subr.mxu0 0.0
    %475 = vmatpush1.msra.mxu0 0.0
    %476 = vmatprep.subr.mxu0 0.0
    %477 = vmatpush1.msra.mxu0 0.0
    %478 = vmatprep.subr.mxu0 0.0
    %479 = vmatpush1.msra.mxu0 0.0
    %480 = vmatprep.subr.mxu0 0.0
    %481 = vmatpush1.msra.mxu0 0.0
    %482 = vmatprep.subr.mxu0 0.0
    %483 = vmatpush1.msra.mxu0 0.0
    %484 = vmatprep.subr.mxu0 0.0
    %485 = vmatpush1.msra.mxu0 0.0
    %486 = vmatprep.subr.mxu0 0.0
    %487 = vmatpush1.msra.mxu0 0.0
    %488 = vmatprep.subr.mxu0 0.0
    %489 = vmatpush1.msra.mxu0 0.0
    %490 = vmatprep.subr.mxu0 0.0
    %491 = vmatpush1.msra.mxu0 0.0
    %492 = vmatprep.subr.mxu0 0.0
    %493 = vmatpush1.msra.mxu0 0.0
    %494 = vmatprep.subr.mxu0 0.0
    %495 = vmatpush1.msra.mxu0 0.0
    %496 = vmatprep.subr.mxu0 0.0
    %497 = vmatpush1.msra.mxu0 0.0
    %498 = vmatprep.subr.mxu0 0.0
    %499 = vmatpush1.msra.mxu0 0.0
    %500 = vmatprep.subr.mxu0 0.0
    %501 = vmatpush1.msra.mxu0 0.0
    %502 = vmatprep.subr.mxu0 0.0
    %503 = vmatpush1.msra.mxu0 0.0
    %504 = vmatprep.subr.mxu0 0.0
    %505 = vmatpush1.msra.mxu0 0.0
    %506 = vmatprep.mubr.f32.mxu0 0.0
    %507 = vmatmul.mubr.f32.gmra.mrb[0].mxu0 %v440
    %v508 = vpop.f32.mrb[0].mxu0
    %v509 = vadd.f32 %v438, %v508
    %v510 = vpop.f32.mrb[0].mxu0
    %511 = vdwg.mxu0
    %v512 = vld [vmem:[%s4] sm:$0x3]
    %v513 = vadd.f32 %v509, %v512
    %v514 = vld [vmem:[%s9] sm:$0x1]
    %v516 = vlaneseq
    %v517 = vshrl.u32 %v516, 7
    %v518 = vsub.s32 0, %v517
    %v519 = vrot.slane %v514, %v518
    %v521 = vadd.f32 %v513, %v519
    %v522 = vxor.u32 %v521, 2147483648
    %v523 = vmul.f32 %v522, 1.442695
    %v524 = vpow.pop %v523
    %v525 = vadd.f32 %v524, 1.0
    %v526 = vrcp.pop %v525
    %v527 = vmul.f32 1.0, %v526
    %v528 = vtanh.pop %v521
    %530 = vrot.lane.b32.xlu0 %v40, 32
    %v531 = vpop.permute.xlu0 %530
    %v533 = vmul.f32 %v527, %v531
    %535 = vrot.lane.b32.xlu0 %v528, 64
    %v536 = vpop.permute.xlu0 %535
    %v538 = vmul.f32 %v527, %v536
    %540 = vrot.lane.b32.xlu0 %v538, 32
    %v541 = vpop.permute.xlu0 %540
    %v543 = vadd.f32 %v533, %v541
    %v544 = vtanh.pop %v543
    %546 = vrot.lane.b32.xlu0 %v544, 64
    %v547 = vpop.permute.xlu0 %546
    %v549 = vmul.f32 %v527, %v547
    %551 = vrot.lane.b32.xlu0 %v549, 32
    %v552 = vpop.permute.xlu0 %551
    %vm554 = vcmask 254976
    %555 = vst.msk [vmem:[%s10] sm:$0x3] %vm554, %v552
    %557 = vrot.lane.b32.xlu0 %v543, 96
    %v558 = vpop.permute.xlu0 %557
    %560 = vst.msk [vmem:[%s11] sm:$0x3] %vm554, %v558
    // Predicated region
    $region42: #{attention_cell_1d.1} parent=1 // pred_check
      _
    $region43: #{attention_cell_1d.1} parent=1 // pred_check_branch
      %562 = sbr.rel (0) target = $region45
    $region44: #{attention_cell_1d.1} parent=1 // pred_region
      _
    $region45: #{attention_cell_1d.1} parent=1 // pred_fallthru
      _
    // Predicated region
    $region46: #{attention_cell_1d.1} parent=1 // pred_check
      _
    $region47: #{attention_cell_1d.1} parent=1 // pred_check_branch
      %564 = sbr.rel (0) target = $region49
    $region48: #{attention_cell_1d.1} parent=1 // pred_region
      _
    $region49: #{attention_cell_1d.1} parent=1 // pred_fallthru
      _
    // Predicated region
    $region50: #{attention_cell_1d.1} parent=1 // pred_check
      _
    $region51: #{attention_cell_1d.1} parent=1 // pred_check_branch
      %566 = sbr.rel (0) target = $region53
    $region52: #{attention_cell_1d.1} parent=1 // pred_region
      %s568 = ssub.s32 32, 32
      %569 = vsyncadd [#allocation3], %s568
      %s571 = sshll.u32 [#allocation2], 4
      %s572 = int_to_ptr.vmem [resolvable:$true] %s571
      %574 = dma.vmem_to_hbm [thread:$0]  %s572, 32, %s12, [#allocation3]
    $region53: #{attention_cell_1d.1} parent=1 // pred_fallthru
      _
    // Predicated region
    $region54: #{attention_cell_1d.1} parent=1 // pred_check
      _
    $region55: #{attention_cell_1d.1} parent=1 // pred_check_branch
      %576 = sbr.rel (0) target = $region57
    $region56: #{attention_cell_1d.1} parent=1 // pred_region
      _
    $region57: #{attention_cell_1d.1} parent=1 // pred_fallthru
      _
    // Predicated region
    $region58: #{attention_cell_1d.1} parent=1 // pred_check
      _
    $region59: #{attention_cell_1d.1} parent=1 // pred_check_branch
      %578 = sbr.rel (0) target = $region61
    $region60: #{attention_cell_1d.1} parent=1 // pred_region
      _
    $region61: #{attention_cell_1d.1} parent=1 // pred_fallthru
      _
    // Predicated region
    $region62: #{attention_cell_1d.1} parent=1 // pred_check
      _
    $region63: #{attention_cell_1d.1} parent=1 // pred_check_branch
      %580 = sbr.rel (0) target = $region65
    $region64: #{attention_cell_1d.1} parent=1 // pred_region
      %581 = dma.done [#allocation3], 32
    $region65: #{attention_cell_1d.1} parent=1 // pred_fallthru
      _
    %582 = vsyncpa [#allocation3], 1

</llo_original>
